<compile_context>
chip_gen: v7x
topology: tpu7x:2x2x1
jax: 0.10.0
libtpu: 0.0.40
codegen_flags: <defaults>
</compile_context>

<pallas_src>
import functools

import jax
import jax.numpy as jnp
from jax.experimental import pallas as pl
from jax.experimental.pallas import tpu as pltpu


# ----------------------------- configuration -------------------------------
INPUT_DIM = 4
CONDITION_DIM = 8
HIDDEN_DIMS = (32, 32)
NUM_FOURIER_FEATURES = 4          # must be even (pairs of sin/cos)

FOURIER_DIM = INPUT_DIM + INPUT_DIM * NUM_FOURIER_FEATURES
DIM_LIST = [FOURIER_DIM] + list(HIDDEN_DIMS) + [INPUT_DIM]
COND_DIM = CONDITION_DIM + 1      # context = cat([t, scene_context], -1)
NUM_LAYERS = len(DIM_LIST) - 1

MAX_TILE_N = 1024                 # points per grid step (lane axis), multiple of 128


def _round_up(x, m):
    return ((x + m - 1) // m) * m


# ------------------------------- kernel ------------------------------------
def _ode_kernel(h_ref, *refs, num_layers, num_fourier):
    """Feature-major FiLM-MLP over one [INPUT_DIM, TILE_N] point tile.

    refs = (Wt_0, gamma_0, beta_0, ..., Wt_{L-1}, gamma_{L-1}, beta_{L-1}, out_ref)
        Wt_l    : [out_l, in_l]   transposed Linear weight (VMEM resident)
        gamma_l : [out_l, 1]      per-batch FiLM scale
        beta_l  : [out_l, 1]      per-batch FiLM shift (Linear bias folded in)
    """
    out_ref = refs[-1]
    p_refs = refs[:-1]

    h = h_ref[...]                                    # [D, TN], points on lanes

    # Positional Fourier features stacked on the sublane (feature) axis:
    #   [x, sin(x), cos(x), sin(2x), cos(2x), ...]
    feats = [h]
    for i in range(num_fourier // 2):
        freq = jnp.float32(2.0 ** i)
        feats.append(jnp.sin(freq * h))
        feats.append(jnp.cos(freq * h))
    hf = jnp.concatenate(feats, axis=0)               # [FOURIER_DIM, TN]

    # FiLM MLP chain: matmuls on the MXU, FiLM/tanh lane-dense on VPU/EUP.
    for l in range(num_layers):
        wt = p_refs[3 * l][...]                       # [out, in]
        gamma = p_refs[3 * l + 1][...]                # [out, 1]
        beta = p_refs[3 * l + 2][...]                 # [out, 1]
        z = jnp.dot(wt, hf, preferred_element_type=jnp.float32)   # [out, TN]
        hf = gamma * z + beta
        if l < num_layers - 1:
            hf = jnp.tanh(hf)

    out_ref[...] = hf.astype(out_ref.dtype)           # lane-dense store [D, TN]


# ------------------------------- wrapper ------------------------------------
def ode_forward(t, h, scene_context, params):
    """Pallas implementation of ODE.forward(t, h, scene_context).

    t:              scalar (float32)
    h:              [B, N, input_dim]
    scene_context:  [B, condition_dim]
    returns flow:   [B, N, input_dim]
    """
    B, N, D = h.shape
    assert D == INPUT_DIM

    # ---- tiling of the point dimension (lane axis; keep it 128-dense) ------
    tile_n = min(_round_up(N, 128), MAX_TILE_N)
    n_pad = _round_up(N, tile_n)
    num_tiles = n_pad // tile_n

    # ---- layout plumbing: feature-major [B, D, N_pad] -----------------------
    h_t = jnp.swapaxes(h.astype(jnp.float32), 1, 2)                    # [B, D, N]
    if n_pad != N:
        h_t = jnp.pad(h_t, ((0, 0), (0, 0), (0, n_pad - N)))

    # ---- per-batch FiLM conditioning (constant over the N points) ----------
    t_col = jnp.full((B, 1), t, dtype=jnp.float32)
    ctx = jnp.concatenate([t_col, scene_context.astype(jnp.float32)], axis=-1)

    flat_params = []
    in_specs = [pl.BlockSpec((None, INPUT_DIM, tile_n), lambda b, n: (b, 0, n))]
    for (W, b, Wg, bg) in params:
        d_in, d_out = W.shape
        fc = ctx @ Wg + bg                                             # [B, 2*out]
        gamma = fc[:, :d_out]                                          # [B, out]
        beta = gamma * b + fc[:, d_out:]                               # fold Linear bias
        flat_params += [W.T, gamma[:, :, None], beta[:, :, None]]
        in_specs += [
            pl.BlockSpec((d_out, d_in), lambda b_, n_: (0, 0)),        # resident weight
            pl.BlockSpec((None, d_out, 1), lambda b_, n_: (b_, 0, 0)),
            pl.BlockSpec((None, d_out, 1), lambda b_, n_: (b_, 0, 0)),
        ]

    kernel = functools.partial(
        _ode_kernel, num_layers=NUM_LAYERS, num_fourier=NUM_FOURIER_FEATURES
    )

    # advisory cost estimate for XLA's scheduler
    m_total = B * n_pad
    flops = 2 * m_total * sum(DIM_LIST[i] * DIM_LIST[i + 1] for i in range(NUM_LAYERS))
    transcendentals = m_total * (INPUT_DIM * NUM_FOURIER_FEATURES + sum(HIDDEN_DIMS))
    param_bytes = 4 * sum(int(x.size) for x in flat_params)
    bytes_accessed = 4 * (2 * m_total * INPUT_DIM) + param_bytes

    out_t = pl.pallas_call(
        kernel,
        out_shape=jax.ShapeDtypeStruct((B, INPUT_DIM, n_pad), jnp.float32),
        grid_spec=pltpu.PrefetchScalarGridSpec(
            num_scalar_prefetch=0,
            grid=(B, num_tiles),
            in_specs=in_specs,
            out_specs=pl.BlockSpec((None, INPUT_DIM, tile_n), lambda b, n: (b, 0, n)),
        ),
        compiler_params=pltpu.CompilerParams(
            dimension_semantics=("parallel", "parallel")
        ),
        cost_estimate=pl.CostEstimate(
            flops=flops, transcendentals=transcendentals, bytes_accessed=bytes_accessed
        ),
    )(h_t, *flat_params)

    # back to tokens-major [B, N, D]
    return jnp.swapaxes(out_t[:, :, :N], 1, 2)


# ----------------------- pure-JAX reference (checking) ----------------------
def ode_forward_ref(t, h, scene_context, params):
    B, N, D = h.shape
    t_exp = jnp.broadcast_to(jnp.asarray(t, jnp.float32), (B, N, 1))
    sc_exp = jnp.broadcast_to(scene_context[:, None, :], (B, N, scene_context.shape[-1]))
    ctx = jnp.concatenate([t_exp, sc_exp], axis=-1)

    feats = [h]
    for i in range(NUM_FOURIER_FEATURES // 2):
        freq = 2.0 ** i
        feats.append(jnp.sin(freq * h))
        feats.append(jnp.cos(freq * h))
    hf = jnp.concatenate(feats, axis=-1)

    for l, (W, b, Wg, bg) in enumerate(params):
        z = hf @ W + b
        fc = ctx @ Wg + bg
        d_out = W.shape[1]
        gamma, beta = fc[..., :d_out], fc[..., d_out:]
        hf = gamma * z + beta
        if l < NUM_LAYERS - 1:
            hf = jnp.tanh(hf)
    return hf


# ------------------------------ param init ----------------------------------
def init_params(key):
    params = []
    for i in range(NUM_LAYERS):
        d_in, d_out = DIM_LIST[i], DIM_LIST[i + 1]
        key, k1, k2, k3, k4 = jax.random.split(key, 5)
        W = jax.random.normal(k1, (d_in, d_out), jnp.float32) / jnp.sqrt(d_in)
        b = jax.random.normal(k2, (1, d_out), jnp.float32) * 0.01
        Wg = jax.random.normal(k3, (COND_DIM, 2 * d_out), jnp.float32) / jnp.sqrt(COND_DIM)
        bg = jax.random.normal(k4, (1, 2 * d_out), jnp.float32) * 0.01
        params.append((W, b, Wg, bg))
    return params


# --------------------------------- main --------------------------------------
if __name__ == "__main__":
    key = jax.random.PRNGKey(0)
    kp, kh, kc = jax.random.split(key, 3)

    B, N = 2, 8
    params = init_params(kp)
    h = jax.random.normal(kh, (B, N, INPUT_DIM), jnp.float32)
    scene_context = jax.random.normal(kc, (B, CONDITION_DIM), jnp.float32)
    t = jnp.float32(0.3)

    flow = ode_forward(t, h, scene_context, params)
    flow = jax.block_until_ready(flow)

    flow_ref = ode_forward_ref(t, h, scene_context, params)
    assert flow.shape == (B, N, INPUT_DIM)
    assert jnp.allclose(flow, flow_ref, atol=1e-3, rtol=1e-3), (
        f"max abs err = {jnp.max(jnp.abs(flow - flow_ref))}"
    )
    print("KERNEL_OK")
</pallas_src>

<mosaic_0001>
module attributes {stable_mosaic.version = 11 : i64} {
  func.func @_ode_kernel(%arg0: i32, %arg1: i32, %arg2: memref<1x4x128xf32, #tpu.memory_space<vmem>>, %arg3: memref<32x20xf32, #tpu.memory_space<vmem>>, %arg4: memref<1x32x1xf32, #tpu.memory_space<vmem>>, %arg5: memref<1x32x1xf32, #tpu.memory_space<vmem>>, %arg6: memref<32x32xf32, #tpu.memory_space<vmem>>, %arg7: memref<1x32x1xf32, #tpu.memory_space<vmem>>, %arg8: memref<1x32x1xf32, #tpu.memory_space<vmem>>, %arg9: memref<4x32xf32, #tpu.memory_space<vmem>>, %arg10: memref<1x4x1xf32, #tpu.memory_space<vmem>>, %arg11: memref<1x4x1xf32, #tpu.memory_space<vmem>>, %arg12: memref<1x4x128xf32, #tpu.memory_space<vmem>>) attributes {dimension_semantics = [#tpu.dimension_semantics<parallel>, #tpu.dimension_semantics<parallel>], iteration_bounds = array<i64: 2, 1>, scalar_prefetch = 0 : i64, scratch_operands = 0 : i64, tpu.core_type = #tpu.core_type<tc>, window_params = [{transform_indices = @transform_0, window_bounds = array<i64: 1, 4, 128>}, {pipeline_mode = #tpu.pipeline_mode<synchronous>, transform_indices = @transform_1, window_bounds = array<i64: 32, 20>}, {transform_indices = @transform_2, window_bounds = array<i64: 1, 32, 1>}, {transform_indices = @transform_3, window_bounds = array<i64: 1, 32, 1>}, {pipeline_mode = #tpu.pipeline_mode<synchronous>, transform_indices = @transform_4, window_bounds = array<i64: 32, 32>}, {transform_indices = @transform_5, window_bounds = array<i64: 1, 32, 1>}, {transform_indices = @transform_6, window_bounds = array<i64: 1, 32, 1>}, {pipeline_mode = #tpu.pipeline_mode<synchronous>, transform_indices = @transform_7, window_bounds = array<i64: 4, 32>}, {transform_indices = @transform_8, window_bounds = array<i64: 1, 4, 1>}, {transform_indices = @transform_9, window_bounds = array<i64: 1, 4, 1>}, {transform_indices = @transform_10, window_bounds = array<i64: 1, 4, 128>}]} {
    %c0 = arith.constant 0 : index
    %c0_0 = arith.constant 0 : index
    %c0_1 = arith.constant 0 : index
    %0 = vector.load %arg2[%c0, %c0_0, %c0_1] : memref<1x4x128xf32, #tpu.memory_space<vmem>>, vector<1x4x128xf32>
    %1 = vector.shape_cast %0 : vector<1x4x128xf32> to vector<4x128xf32>
    %cst = arith.constant 1.000000e+00 : f32
    %2 = vector.broadcast %cst : f32 to vector<4x128xf32>
    %3 = arith.mulf %2, %1 : vector<4x128xf32>
    %4 = math.sin %3 : vector<4x128xf32>
    %cst_2 = arith.constant 1.000000e+00 : f32
    %5 = vector.broadcast %cst_2 : f32 to vector<4x128xf32>
    %6 = arith.mulf %5, %1 : vector<4x128xf32>
    %7 = math.cos %6 : vector<4x128xf32>
    %cst_3 = arith.constant 2.000000e+00 : f32
    %8 = vector.broadcast %cst_3 : f32 to vector<4x128xf32>
    %9 = arith.mulf %8, %1 : vector<4x128xf32>
    %10 = math.sin %9 : vector<4x128xf32>
    %cst_4 = arith.constant 2.000000e+00 : f32
    %11 = vector.broadcast %cst_4 : f32 to vector<4x128xf32>
    %12 = arith.mulf %11, %1 : vector<4x128xf32>
    %13 = math.cos %12 : vector<4x128xf32>
    %14 = tpu.concatenate %1, %4, %7, %10, %13 in 0 : vector<4x128xf32>, vector<4x128xf32>, vector<4x128xf32>, vector<4x128xf32>, vector<4x128xf32> -> vector<20x128xf32>
    %c0_5 = arith.constant 0 : index
    %c0_6 = arith.constant 0 : index
    %15 = vector.load %arg3[%c0_5, %c0_6] : memref<32x20xf32, #tpu.memory_space<vmem>>, vector<32x20xf32>
    %c0_7 = arith.constant 0 : index
    %c0_8 = arith.constant 0 : index
    %c0_9 = arith.constant 0 : index
    %16 = vector.load %arg4[%c0_7, %c0_8, %c0_9] : memref<1x32x1xf32, #tpu.memory_space<vmem>>, vector<1x32x1xf32>
    %17 = vector.shape_cast %16 : vector<1x32x1xf32> to vector<32x1xf32>
    %c0_10 = arith.constant 0 : index
    %c0_11 = arith.constant 0 : index
    %c0_12 = arith.constant 0 : index
    %18 = vector.load %arg5[%c0_10, %c0_11, %c0_12] : memref<1x32x1xf32, #tpu.memory_space<vmem>>, vector<1x32x1xf32>
    %19 = vector.shape_cast %18 : vector<1x32x1xf32> to vector<32x1xf32>
    %cst_13 = arith.constant dense<0.000000e+00> : vector<32x128xf32>
    %20 = tpu.matmul %15, %14, %cst_13 {dimension_numbers = #tpu.dot_dimension_numbers<[1], [0], [0], [1], [0, 0, 1, 1], [], []>} : vector<32x20xf32>, vector<20x128xf32>, vector<32x128xf32> -> vector<32x128xf32>
    %21 = vector.broadcast %17 : vector<32x1xf32> to vector<32x128xf32>
    %22 = arith.mulf %21, %20 : vector<32x128xf32>
    %23 = vector.broadcast %19 : vector<32x1xf32> to vector<32x128xf32>
    %24 = arith.addf %22, %23 : vector<32x128xf32>
    %25 = math.tanh %24 : vector<32x128xf32>
    %c0_14 = arith.constant 0 : index
    %c0_15 = arith.constant 0 : index
    %26 = vector.load %arg6[%c0_14, %c0_15] : memref<32x32xf32, #tpu.memory_space<vmem>>, vector<32x32xf32>
    %c0_16 = arith.constant 0 : index
    %c0_17 = arith.constant 0 : index
    %c0_18 = arith.constant 0 : index
    %27 = vector.load %arg7[%c0_16, %c0_17, %c0_18] : memref<1x32x1xf32, #tpu.memory_space<vmem>>, vector<1x32x1xf32>
    %28 = vector.shape_cast %27 : vector<1x32x1xf32> to vector<32x1xf32>
    %c0_19 = arith.constant 0 : index
    %c0_20 = arith.constant 0 : index
    %c0_21 = arith.constant 0 : index
    %29 = vector.load %arg8[%c0_19, %c0_20, %c0_21] : memref<1x32x1xf32, #tpu.memory_space<vmem>>, vector<1x32x1xf32>
    %30 = vector.shape_cast %29 : vector<1x32x1xf32> to vector<32x1xf32>
    %cst_22 = arith.constant dense<0.000000e+00> : vector<32x128xf32>
    %31 = tpu.matmul %26, %25, %cst_22 {dimension_numbers = #tpu.dot_dimension_numbers<[1], [0], [0], [1], [0, 0, 1, 1], [], []>} : vector<32x32xf32>, vector<32x128xf32>, vector<32x128xf32> -> vector<32x128xf32>
    %32 = vector.broadcast %28 : vector<32x1xf32> to vector<32x128xf32>
    %33 = arith.mulf %32, %31 : vector<32x128xf32>
    %34 = vector.broadcast %30 : vector<32x1xf32> to vector<32x128xf32>
    %35 = arith.addf %33, %34 : vector<32x128xf32>
    %36 = math.tanh %35 : vector<32x128xf32>
    %c0_23 = arith.constant 0 : index
    %c0_24 = arith.constant 0 : index
    %37 = vector.load %arg9[%c0_23, %c0_24] : memref<4x32xf32, #tpu.memory_space<vmem>>, vector<4x32xf32>
    %c0_25 = arith.constant 0 : index
    %c0_26 = arith.constant 0 : index
    %c0_27 = arith.constant 0 : index
    %38 = vector.load %arg10[%c0_25, %c0_26, %c0_27] : memref<1x4x1xf32, #tpu.memory_space<vmem>>, vector<1x4x1xf32>
    %39 = vector.shape_cast %38 : vector<1x4x1xf32> to vector<4x1xf32>
    %c0_28 = arith.constant 0 : index
    %c0_29 = arith.constant 0 : index
    %c0_30 = arith.constant 0 : index
    %40 = vector.load %arg11[%c0_28, %c0_29, %c0_30] : memref<1x4x1xf32, #tpu.memory_space<vmem>>, vector<1x4x1xf32>
    %41 = vector.shape_cast %40 : vector<1x4x1xf32> to vector<4x1xf32>
    %cst_31 = arith.constant dense<0.000000e+00> : vector<4x128xf32>
    %42 = tpu.matmul %37, %36, %cst_31 {dimension_numbers = #tpu.dot_dimension_numbers<[1], [0], [0], [1], [0, 0, 1, 1], [], []>} : vector<4x32xf32>, vector<32x128xf32>, vector<4x128xf32> -> vector<4x128xf32>
    %43 = vector.broadcast %39 : vector<4x1xf32> to vector<4x128xf32>
    %44 = arith.mulf %43, %42 : vector<4x128xf32>
    %45 = vector.broadcast %41 : vector<4x1xf32> to vector<4x128xf32>
    %46 = arith.addf %44, %45 : vector<4x128xf32>
    %c0_32 = arith.constant 0 : index
    %c0_33 = arith.constant 0 : index
    %c0_34 = arith.constant 0 : index
    %47 = vector.load %arg12[%c0_32, %c0_33, %c0_34] : memref<1x4x128xf32, #tpu.memory_space<vmem>>, vector<1x4x128xf32>
    %48 = vector.shape_cast %47 : vector<1x4x128xf32> to vector<4x128xf32>
    %49 = vector.shape_cast %46 : vector<4x128xf32> to vector<1x4x128xf32>
    tpu.vector_store %arg12[%c0_32, %c0_33, %c0_34], %49 {strides = array<i32>} : memref<1x4x128xf32, #tpu.memory_space<vmem>>, vector<1x4x128xf32>,
    return
  }
  func.func @transform_0(%arg0: i32, %arg1: i32) -> (i32, i32, i32) {
    %c0_i32 = arith.constant 0 : i32
    %c0_i32_0 = arith.constant 0 : i32
    return %arg0, %c0_i32, %arg1 : i32, i32, i32
  }
  func.func @transform_1(%arg0: i32, %arg1: i32) -> (i32, i32) {
    %c0_i32 = arith.constant 0 : i32
    %c0_i32_0 = arith.constant 0 : i32
    %c0_i32_1 = arith.constant 0 : i32
    return %c0_i32, %c0_i32_0 : i32, i32
  }
  func.func @transform_2(%arg0: i32, %arg1: i32) -> (i32, i32, i32) {
    %c0_i32 = arith.constant 0 : i32
    %c0_i32_0 = arith.constant 0 : i32
    %c0_i32_1 = arith.constant 0 : i32
    return %arg0, %c0_i32, %c0_i32_0 : i32, i32, i32
  }
  func.func @transform_3(%arg0: i32, %arg1: i32) -> (i32, i32, i32) {
    %c0_i32 = arith.constant 0 : i32
    %c0_i32_0 = arith.constant 0 : i32
    %c0_i32_1 = arith.constant 0 : i32
    return %arg0, %c0_i32, %c0_i32_0 : i32, i32, i32
  }
  func.func @transform_4(%arg0: i32, %arg1: i32) -> (i32, i32) {
    %c0_i32 = arith.constant 0 : i32
    %c0_i32_0 = arith.constant 0 : i32
    %c0_i32_1 = arith.constant 0 : i32
    return %c0_i32, %c0_i32_0 : i32, i32
  }
  func.func @transform_5(%arg0: i32, %arg1: i32) -> (i32, i32, i32) {
    %c0_i32 = arith.constant 0 : i32
    %c0_i32_0 = arith.constant 0 : i32
    %c0_i32_1 = arith.constant 0 : i32
    return %arg0, %c0_i32, %c0_i32_0 : i32, i32, i32
  }
  func.func @transform_6(%arg0: i32, %arg1: i32) -> (i32, i32, i32) {
    %c0_i32 = arith.constant 0 : i32
    %c0_i32_0 = arith.constant 0 : i32
    %c0_i32_1 = arith.constant 0 : i32
    return %arg0, %c0_i32, %c0_i32_0 : i32, i32, i32
  }
  func.func @transform_7(%arg0: i32, %arg1: i32) -> (i32, i32) {
    %c0_i32 = arith.constant 0 : i32
    %c0_i32_0 = arith.constant 0 : i32
    %c0_i32_1 = arith.constant 0 : i32
    return %c0_i32, %c0_i32_0 : i32, i32
  }
  func.func @transform_8(%arg0: i32, %arg1: i32) -> (i32, i32, i32) {
    %c0_i32 = arith.constant 0 : i32
    %c0_i32_0 = arith.constant 0 : i32
    %c0_i32_1 = arith.constant 0 : i32
    return %arg0, %c0_i32, %c0_i32_0 : i32, i32, i32
  }
  func.func @transform_9(%arg0: i32, %arg1: i32) -> (i32, i32, i32) {
    %c0_i32 = arith.constant 0 : i32
    %c0_i32_0 = arith.constant 0 : i32
    %c0_i32_1 = arith.constant 0 : i32
    return %arg0, %c0_i32, %c0_i32_0 : i32, i32, i32
  }
  func.func @transform_10(%arg0: i32, %arg1: i32) -> (i32, i32, i32) {
    %c0_i32 = arith.constant 0 : i32
    %c0_i32_0 = arith.constant 0 : i32
    return %arg0, %c0_i32, %arg1 : i32, i32, i32
  }
}

</mosaic_0001>

<llo_original>
// kernel: tpu_custom_call.1
$region0: #{tpu_custom_call.1}
  #allocation0 [shape = 'u32[]', space=smem, size = 0x4, offset = 0x4, fixed_abs, tag = 'smem constant byte address 0x4 - core index']
  #allocation1 [shape = 'u32[144,128]{1,0:T(1,128)}', space=vmem, size = 0x12000, scoped, tag = 'internal scratch']
  %s0 = inlined_call_operand.vmem [shape: f32[2,4,128], index: 0, kind: input, shape index: {}]
  %s1 = inlined_call_operand.vmem [shape: f32[32,20], index: 1, kind: input, shape index: {}]
  %s2 = inlined_call_operand.vmem [shape: f32[2,32,1], index: 2, kind: input, shape index: {}]
  %s3 = inlined_call_operand.vmem [shape: f32[2,32,1], index: 3, kind: input, shape index: {}]
  %s4 = inlined_call_operand.vmem [shape: f32[32,32], index: 4, kind: input, shape index: {}]
  %s5 = inlined_call_operand.vmem [shape: f32[2,32,1], index: 5, kind: input, shape index: {}]
  %s6 = inlined_call_operand.vmem [shape: f32[2,32,1], index: 6, kind: input, shape index: {}]
  %s7 = inlined_call_operand.vmem [shape: f32[4,32], index: 7, kind: input, shape index: {}]
  %s8 = inlined_call_operand.vmem [shape: f32[2,4,1], index: 8, kind: input, shape index: {}]
  %s9 = inlined_call_operand.vmem [shape: f32[2,4,1], index: 9, kind: input, shape index: {}]
  %s10 = inlined_call_operand.hbm [shape: f32[2,4,128], index: 10, kind: output, shape index: {}]
  %s11 = sld [smem:[#allocation0]]
  $region73: #{tpu_custom_call.1} parent=0
    _
  %s13 = ssub.s32 1, %s11
  %s14 = scalar_select 0, %s13, %s11
  $region1: #{tpu_custom_call.1} parent=0
    #allocation2 [shape = 'u8[4096]{0}', space=vmem, size = 0x1000, scoped, tag = 'output window, operand 0']
    #allocation3 [shape = 's32[2]{0}', space=sflag, size = 0x8, scoped, tag = 'scoped memory for tpu_custom_call.1']
    %15 = vsyncpa [#allocation3], 0
    %s16 = scalar_lea.sflag [#allocation3], 1
    %17 = vsyncpa %s16, 0
    loop: start=0, step=1, limit=4
    $region2: #{tpu_custom_call.1} parent=1 // loop_pre_header
      _
    $region3: #{tpu_custom_call.1} parent=1 // loop_header
      %s19 = sphi 0, %s23
      %p20 = scmp.ge.s32.totalorder %s19, 4
      %s26 = sphi 0, %s38
      %s27 = sphi 0, %s34
      %s28 = sphi 0, %s26
      %s29 = sphi 0, %s27
      %s30 = sphi 0, %s28
      %s31 = sphi 0, %s29
      %s43 = sphi 0, %s45
      %s46 = sphi 0, %s43
      %s47 = sphi 0, %s46
      %s63 = sphi 0, %s47
      %s67 = sphi 0, %s67
      %s69 = sphi 0, %s67
      %s70 = sphi 0, %s69
      %s84 = sphi 0, %s70
      %s90 = sphi 0, %s92
      %s93 = sphi 0, %s90
      %s94 = sphi 0, %s93
      %s110 = sphi 0, %s94
      %s116 = sphi 0, %s118
      %s119 = sphi 0, %s116
      %s120 = sphi 0, %s119
      %s136 = sphi 0, %s120
      %s140 = sphi 0, %s140
      %s142 = sphi 0, %s140
      %s143 = sphi 0, %s142
      %s157 = sphi 0, %s143
      %s163 = sphi 0, %s165
      %s166 = sphi 0, %s163
      %s167 = sphi 0, %s166
      %s183 = sphi 0, %s167
      %s189 = sphi 0, %s191
      %s192 = sphi 0, %s189
      %s193 = sphi 0, %s192
      %s209 = sphi 0, %s193
      %s213 = sphi 0, %s213
      %s215 = sphi 0, %s213
      %s216 = sphi 0, %s215
      %s230 = sphi 0, %s216
      %s236 = sphi 0, %s238
      %s239 = sphi 0, %s236
      %s240 = sphi 0, %s239
      %s256 = sphi 0, %s240
      %s262 = sphi 0, %s264
      %s265 = sphi 0, %s262
      %s266 = sphi 0, %s265
      %s282 = sphi 0, %s266
      %s290 = sphi 0, %s292
      %s293 = sphi 0, %s290
      %s294 = sphi 0, %s293
      %s310 = sphi 0, %s294
    $region4: #{tpu_custom_call.1} parent=1 // loop_header_branch
      %22 = sbr.rel (%p20) target = $region8
    $region5: #{tpu_custom_call.1} parent=1 // loop_body
      %s24 = ssub.s32 %s19, 1
      %s25 = ssub.s32 %s19, 2
      %s32 = sadd.s32 1, %s27
      %p33 = scmp.ge.s32.totalorder %s32, 1
      %s34 = scalar_select %p33, 0, %s32
      %s35 = sadd.s32 1, %s26
      %s36 = scalar_select %p33, %s35, %s26
      %p37 = scmp.ge.s32.totalorder %s36, 2
      %s38 = scalar_select %p37, 0, %s36
      %s39 = ssub.s32 %s26, %s38
      %s40 = ssub.s32 %s27, %s34
      %s41 = sor.u32 %s39, %s40
      %p42 = scmp.eq.s32.totalorder %s41, 0
      %s44 = sadd.s32 %s43, 1
      %s45 = scalar_select %p42, %s43, %s44
      %p48 = pneg %p42
      %p49 = scmp.eq.s32.totalorder %s19, 1
      %p50 = por %p48, %p49
      %p51 = scmp.ne.s32.totalorder %s43, %s46
      %p52 = scmp.eq.s32.totalorder %s19, 0
      %p53 = por %p51, %p52
      %p54 = scmp.ne.s32.totalorder %s43, %s46
      %p55 = scmp.eq.s32.totalorder %s24, 1
      %p56 = por %p54, %p55
      %p57 = scmp.ne.s32.totalorder %s46, %s47
      %p58 = scmp.eq.s32.totalorder %s24, 0
      %p59 = por %p57, %p58
      %p60 = scmp.ne.s32.totalorder %s46, %s47
      %p61 = scmp.eq.s32.totalorder %s25, 1
      %p62 = por %p60, %p61
      %p64 = scmp.ne.s32.totalorder %s47, %s63
      %p65 = scmp.eq.s32.totalorder %s25, 0
      %p66 = por %p64, %p65
      %s68 = sadd.s32 %s67, 1
      %p71 = scmp.eq.s32.totalorder %s19, 1
      %p72 = scmp.ne.s32.totalorder %s67, %s69
      %p73 = scmp.eq.s32.totalorder %s19, 0
      %p74 = por %p72, %p73
      %p75 = scmp.ne.s32.totalorder %s67, %s69
      %p76 = scmp.eq.s32.totalorder %s24, 1
      %p77 = por %p75, %p76
      %p78 = scmp.ne.s32.totalorder %s69, %s70
      %p79 = scmp.eq.s32.totalorder %s24, 0
      %p80 = por %p78, %p79
      %p81 = scmp.ne.s32.totalorder %s69, %s70
      %p82 = scmp.eq.s32.totalorder %s25, 1
      %p83 = por %p81, %p82
      %p85 = scmp.ne.s32.totalorder %s70, %s84
      %p86 = scmp.eq.s32.totalorder %s25, 0
      %p87 = por %p85, %p86
      %s88 = ssub.s32 %s26, %s38
      %p89 = scmp.eq.s32.totalorder %s88, 0
      %s91 = sadd.s32 %s90, 1
      %s92 = scalar_select %p89, %s90, %s91
      %p95 = pneg %p89
      %p96 = scmp.eq.s32.totalorder %s19, 1
      %p97 = por %p95, %p96
      %p98 = scmp.ne.s32.totalorder %s90, %s93
      %p99 = scmp.eq.s32.totalorder %s19, 0
      %p100 = por %p98, %p99
      %p101 = scmp.ne.s32.totalorder %s90, %s93
      %p102 = scmp.eq.s32.totalorder %s24, 1
      %p103 = por %p101, %p102
      %p104 = scmp.ne.s32.totalorder %s93, %s94
      %p105 = scmp.eq.s32.totalorder %s24, 0
      %p106 = por %p104, %p105
      %p107 = scmp.ne.s32.totalorder %s93, %s94
      %p108 = scmp.eq.s32.totalorder %s25, 1
      %p109 = por %p107, %p108
      %p111 = scmp.ne.s32.totalorder %s94, %s110
      %p112 = scmp.eq.s32.totalorder %s25, 0
      %p113 = por %p111, %p112
      %s114 = ssub.s32 %s26, %s38
      %p115 = scmp.eq.s32.totalorder %s114, 0
      %s117 = sadd.s32 %s116, 1
      %s118 = scalar_select %p115, %s116, %s117
      %p121 = pneg %p115
      %p122 = scmp.eq.s32.totalorder %s19, 1
      %p123 = por %p121, %p122
      %p124 = scmp.ne.s32.totalorder %s116, %s119
      %p125 = scmp.eq.s32.totalorder %s19, 0
      %p126 = por %p124, %p125
      %p127 = scmp.ne.s32.totalorder %s116, %s119
      %p128 = scmp.eq.s32.totalorder %s24, 1
      %p129 = por %p127, %p128
      %p130 = scmp.ne.s32.totalorder %s119, %s120
      %p131 = scmp.eq.s32.totalorder %s24, 0
      %p132 = por %p130, %p131
      %p133 = scmp.ne.s32.totalorder %s119, %s120
      %p134 = scmp.eq.s32.totalorder %s25, 1
      %p135 = por %p133, %p134
      %p137 = scmp.ne.s32.totalorder %s120, %s136
      %p138 = scmp.eq.s32.totalorder %s25, 0
      %p139 = por %p137, %p138
      %s141 = sadd.s32 %s140, 1
      %p144 = scmp.eq.s32.totalorder %s19, 1
      %p145 = scmp.ne.s32.totalorder %s140, %s142
      %p146 = scmp.eq.s32.totalorder %s19, 0
      %p147 = por %p145, %p146
      %p148 = scmp.ne.s32.totalorder %s140, %s142
      %p149 = scmp.eq.s32.totalorder %s24, 1
      %p150 = por %p148, %p149
      %p151 = scmp.ne.s32.totalorder %s142, %s143
      %p152 = scmp.eq.s32.totalorder %s24, 0
      %p153 = por %p151, %p152
      %p154 = scmp.ne.s32.totalorder %s142, %s143
      %p155 = scmp.eq.s32.totalorder %s25, 1
      %p156 = por %p154, %p155
      %p158 = scmp.ne.s32.totalorder %s143, %s157
      %p159 = scmp.eq.s32.totalorder %s25, 0
      %p160 = por %p158, %p159
      %s161 = ssub.s32 %s26, %s38
      %p162 = scmp.eq.s32.totalorder %s161, 0
      %s164 = sadd.s32 %s163, 1
      %s165 = scalar_select %p162, %s163, %s164
      %p168 = pneg %p162
      %p169 = scmp.eq.s32.totalorder %s19, 1
      %p170 = por %p168, %p169
      %p171 = scmp.ne.s32.totalorder %s163, %s166
      %p172 = scmp.eq.s32.totalorder %s19, 0
      %p173 = por %p171, %p172
      %p174 = scmp.ne.s32.totalorder %s163, %s166
      %p175 = scmp.eq.s32.totalorder %s24, 1
      %p176 = por %p174, %p175
      %p177 = scmp.ne.s32.totalorder %s166, %s167
      %p178 = scmp.eq.s32.totalorder %s24, 0
      %p179 = por %p177, %p178
      %p180 = scmp.ne.s32.totalorder %s166, %s167
      %p181 = scmp.eq.s32.totalorder %s25, 1
      %p182 = por %p180, %p181
      %p184 = scmp.ne.s32.totalorder %s167, %s183
      %p185 = scmp.eq.s32.totalorder %s25, 0
      %p186 = por %p184, %p185
      %s187 = ssub.s32 %s26, %s38
      %p188 = scmp.eq.s32.totalorder %s187, 0
      %s190 = sadd.s32 %s189, 1
      %s191 = scalar_select %p188, %s189, %s190
      %p194 = pneg %p188
      %p195 = scmp.eq.s32.totalorder %s19, 1
      %p196 = por %p194, %p195
      %p197 = scmp.ne.s32.totalorder %s189, %s192
      %p198 = scmp.eq.s32.totalorder %s19, 0
      %p199 = por %p197, %p198
      %p200 = scmp.ne.s32.totalorder %s189, %s192
      %p201 = scmp.eq.s32.totalorder %s24, 1
      %p202 = por %p200, %p201
      %p203 = scmp.ne.s32.totalorder %s192, %s193
      %p204 = scmp.eq.s32.totalorder %s24, 0
      %p205 = por %p203, %p204
      %p206 = scmp.ne.s32.totalorder %s192, %s193
      %p207 = scmp.eq.s32.totalorder %s25, 1
      %p208 = por %p206, %p207
      %p210 = scmp.ne.s32.totalorder %s193, %s209
      %p211 = scmp.eq.s32.totalorder %s25, 0
      %p212 = por %p210, %p211
      %s214 = sadd.s32 %s213, 1
      %p217 = scmp.eq.s32.totalorder %s19, 1
      %p218 = scmp.ne.s32.totalorder %s213, %s215
      %p219 = scmp.eq.s32.totalorder %s19, 0
      %p220 = por %p218, %p219
      %p221 = scmp.ne.s32.totalorder %s213, %s215
      %p222 = scmp.eq.s32.totalorder %s24, 1
      %p223 = por %p221, %p222
      %p224 = scmp.ne.s32.totalorder %s215, %s216
      %p225 = scmp.eq.s32.totalorder %s24, 0
      %p226 = por %p224, %p225
      %p227 = scmp.ne.s32.totalorder %s215, %s216
      %p228 = scmp.eq.s32.totalorder %s25, 1
      %p229 = por %p227, %p228
      %p231 = scmp.ne.s32.totalorder %s216, %s230
      %p232 = scmp.eq.s32.totalorder %s25, 0
      %p233 = por %p231, %p232
      %s234 = ssub.s32 %s26, %s38
      %p235 = scmp.eq.s32.totalorder %s234, 0
      %s237 = sadd.s32 %s236, 1
      %s238 = scalar_select %p235, %s236, %s237
      %p241 = pneg %p235
      %p242 = scmp.eq.s32.totalorder %s19, 1
      %p243 = por %p241, %p242
      %p244 = scmp.ne.s32.totalorder %s236, %s239
      %p245 = scmp.eq.s32.totalorder %s19, 0
      %p246 = por %p244, %p245
      %p247 = scmp.ne.s32.totalorder %s236, %s239
      %p248 = scmp.eq.s32.totalorder %s24, 1
      %p249 = por %p247, %p248
      %p250 = scmp.ne.s32.totalorder %s239, %s240
      %p251 = scmp.eq.s32.totalorder %s24, 0
      %p252 = por %p250, %p251
      %p253 = scmp.ne.s32.totalorder %s239, %s240
      %p254 = scmp.eq.s32.totalorder %s25, 1
      %p255 = por %p253, %p254
      %p257 = scmp.ne.s32.totalorder %s240, %s256
      %p258 = scmp.eq.s32.totalorder %s25, 0
      %p259 = por %p257, %p258
      %s260 = ssub.s32 %s26, %s38
      %p261 = scmp.eq.s32.totalorder %s260, 0
      %s263 = sadd.s32 %s262, 1
      %s264 = scalar_select %p261, %s262, %s263
      %p267 = pneg %p261
      %p268 = scmp.eq.s32.totalorder %s19, 1
      %p269 = por %p267, %p268
      %p270 = scmp.ne.s32.totalorder %s262, %s265
      %p271 = scmp.eq.s32.totalorder %s19, 0
      %p272 = por %p270, %p271
      %p273 = scmp.ne.s32.totalorder %s262, %s265
      %p274 = scmp.eq.s32.totalorder %s24, 1
      %p275 = por %p273, %p274
      %p276 = scmp.ne.s32.totalorder %s265, %s266
      %p277 = scmp.eq.s32.totalorder %s24, 0
      %p278 = por %p276, %p277
      %p279 = scmp.ne.s32.totalorder %s265, %s266
      %p280 = scmp.eq.s32.totalorder %s25, 1
      %p281 = por %p279, %p280
      %p283 = scmp.ne.s32.totalorder %s266, %s282
      %p284 = scmp.eq.s32.totalorder %s25, 0
      %p285 = por %p283, %p284
      %s286 = ssub.s32 %s26, %s38
      %s287 = ssub.s32 %s27, %s34
      %s288 = sor.u32 %s286, %s287
      %p289 = scmp.eq.s32.totalorder %s288, 0
      %s291 = sadd.s32 %s290, 1
      %s292 = scalar_select %p289, %s290, %s291
      %p295 = pneg %p289
      %p296 = scmp.eq.s32.totalorder %s19, 1
      %p297 = por %p295, %p296
      %p298 = scmp.ne.s32.totalorder %s290, %s293
      %p299 = scmp.eq.s32.totalorder %s19, 0
      %p300 = por %p298, %p299
      %p301 = scmp.ne.s32.totalorder %s290, %s293
      %p302 = scmp.eq.s32.totalorder %s24, 1
      %p303 = por %p301, %p302
      %p304 = scmp.ne.s32.totalorder %s293, %s294
      %p305 = scmp.eq.s32.totalorder %s24, 0
      %p306 = por %p304, %p305
      %p307 = scmp.ne.s32.totalorder %s293, %s294
      %p308 = scmp.eq.s32.totalorder %s25, 1
      %p309 = por %p307, %p308
      %p311 = scmp.ne.s32.totalorder %s294, %s310
      %p312 = scmp.eq.s32.totalorder %s25, 0
      %p313 = por %p311, %p312
      %p314 = scmp.le.s32.totalorder 1, %s19
      %p315 = scmp.lt.s32.totalorder %s19, 3
      %p316 = pnand %p314, %p315
      %p317 = pneg %p316
      // Predicated region
      $region9: #{tpu_custom_call.1} parent=5 // pred_check
        _
      $region10: #{tpu_custom_call.1} parent=5 // pred_check_branch
        %319 = sbr.rel (%p316) target = $region12
      $region11: #{tpu_custom_call.1} parent=5 // pred_region
        %s320 = ssub.s32 %s19, 1
        // Predicated region
        $region13: #{tpu_custom_call.1} parent=11 // pred_check
          %p321 = pneg %p80
        $region14: #{tpu_custom_call.1} parent=11 // pred_check_branch
          %323 = sbr.rel (%p321) target = $region16
        $region15: #{tpu_custom_call.1} parent=11 // pred_region
          _
        $region16: #{tpu_custom_call.1} parent=11 // pred_fallthru
          _
        // Predicated region
        $region17: #{tpu_custom_call.1} parent=11 // pred_check
          %p324 = pneg %p153
        $region18: #{tpu_custom_call.1} parent=11 // pred_check_branch
          %326 = sbr.rel (%p324) target = $region20
        $region19: #{tpu_custom_call.1} parent=11 // pred_region
          _
        $region20: #{tpu_custom_call.1} parent=11 // pred_fallthru
          _
        // Predicated region
        $region21: #{tpu_custom_call.1} parent=11 // pred_check
          %p327 = pneg %p226
        $region22: #{tpu_custom_call.1} parent=11 // pred_check_branch
          %329 = sbr.rel (%p327) target = $region24
        $region23: #{tpu_custom_call.1} parent=11 // pred_region
          _
        $region24: #{tpu_custom_call.1} parent=11 // pred_fallthru
          _
      $region12: #{tpu_custom_call.1} parent=5 // pred_fallthru
        _
      %p330 = scmp.lt.s32.totalorder %s19, 2
      // Predicated region
      $region25: #{tpu_custom_call.1} parent=5 // pred_check
        %p331 = pneg %p330
      $region26: #{tpu_custom_call.1} parent=5 // pred_check_branch
        %333 = sbr.rel (%p331) target = $region28
      $region27: #{tpu_custom_call.1} parent=5 // pred_region
        // Predicated region
        $region29: #{tpu_custom_call.1} parent=27 // pred_check
          %p334 = pneg %p53
        $region30: #{tpu_custom_call.1} parent=27 // pred_check_branch
          %336 = sbr.rel (%p334) target = $region32
        $region31: #{tpu_custom_call.1} parent=27 // pred_region
          %p337 = scmp.lt.s32.totalorder %s26, 1
          %s338 = scalar_select %p337, %s26, 1
          %p339 = scmp.lt.s32.totalorder %s27, 0
          %s340 = scalar_select %p339, %s27, 0
          %s341 = sadd.s32 %s340, %s338
          %s342 = smul.addr %s341, 4
          %s343 = scalar_lea.vmem %s0, %s342
        $region32: #{tpu_custom_call.1} parent=27 // pred_fallthru
          _
        // Predicated region
        $region33: #{tpu_custom_call.1} parent=27 // pred_check
          %p344 = pneg %p100
        $region34: #{tpu_custom_call.1} parent=27 // pred_check_branch
          %346 = sbr.rel (%p344) target = $region36
        $region35: #{tpu_custom_call.1} parent=27 // pred_region
          %p347 = scmp.lt.s32.totalorder %s26, 1
          %s348 = scalar_select %p347, %s26, 1
          %s349 = smul.addr %s348, 4
          %s350 = smul.addr %s349, 8
          %s351 = scalar_lea.vmem %s2, %s350
        $region36: #{tpu_custom_call.1} parent=27 // pred_fallthru
          _
        // Predicated region
        $region37: #{tpu_custom_call.1} parent=27 // pred_check
          %p352 = pneg %p126
        $region38: #{tpu_custom_call.1} parent=27 // pred_check_branch
          %354 = sbr.rel (%p352) target = $region40
        $region39: #{tpu_custom_call.1} parent=27 // pred_region
          %p355 = scmp.lt.s32.totalorder %s26, 1
          %s356 = scalar_select %p355, %s26, 1
          %s357 = smul.addr %s356, 4
          %s358 = smul.addr %s357, 8
          %s359 = scalar_lea.vmem %s3, %s358
        $region40: #{tpu_custom_call.1} parent=27 // pred_fallthru
          _
        // Predicated region
        $region41: #{tpu_custom_call.1} parent=27 // pred_check
          %p360 = pneg %p173
        $region42: #{tpu_custom_call.1} parent=27 // pred_check_branch
          %362 = sbr.rel (%p360) target = $region44
        $region43: #{tpu_custom_call.1} parent=27 // pred_region
          %p363 = scmp.lt.s32.totalorder %s26, 1
          %s364 = scalar_select %p363, %s26, 1
          %s365 = smul.addr %s364, 4
          %s366 = smul.addr %s365, 8
          %s367 = scalar_lea.vmem %s5, %s366
        $region44: #{tpu_custom_call.1} parent=27 // pred_fallthru
          _
        // Predicated region
        $region45: #{tpu_custom_call.1} parent=27 // pred_check
          %p368 = pneg %p199
        $region46: #{tpu_custom_call.1} parent=27 // pred_check_branch
          %370 = sbr.rel (%p368) target = $region48
        $region47: #{tpu_custom_call.1} parent=27 // pred_region
          %p371 = scmp.lt.s32.totalorder %s26, 1
          %s372 = scalar_select %p371, %s26, 1
          %s373 = smul.addr %s372, 4
          %s374 = smul.addr %s373, 8
          %s375 = scalar_lea.vmem %s6, %s374
        $region48: #{tpu_custom_call.1} parent=27 // pred_fallthru
          _
        // Predicated region
        $region49: #{tpu_custom_call.1} parent=27 // pred_check
          %p376 = pneg %p246
        $region50: #{tpu_custom_call.1} parent=27 // pred_check_branch
          %378 = sbr.rel (%p376) target = $region52
        $region51: #{tpu_custom_call.1} parent=27 // pred_region
          %p379 = scmp.lt.s32.totalorder %s26, 1
          %s380 = scalar_select %p379, %s26, 1
          %s381 = smul.addr %s380, 4
          %s382 = scalar_lea.vmem %s8, %s381
        $region52: #{tpu_custom_call.1} parent=27 // pred_fallthru
          _
        // Predicated region
        $region53: #{tpu_custom_call.1} parent=27 // pred_check
          %p383 = pneg %p272
        $region54: #{tpu_custom_call.1} parent=27 // pred_check_branch
          %385 = sbr.rel (%p383) target = $region56
        $region55: #{tpu_custom_call.1} parent=27 // pred_region
          %p386 = scmp.lt.s32.totalorder %s26, 1
          %s387 = scalar_select %p386, %s26, 1
          %s388 = smul.addr %s387, 4
          %s389 = scalar_lea.vmem %s9, %s388
        $region56: #{tpu_custom_call.1} parent=27 // pred_fallthru
          _
      $region28: #{tpu_custom_call.1} parent=5 // pred_fallthru
        _
      %p390 = scmp.le.s32.totalorder 1, %s19
      %p391 = scmp.lt.s32.totalorder %s19, 3
      %p392 = pnand %p390, %p391
      %p393 = pneg %p392
      // Predicated region
      $region57: #{tpu_custom_call.1} parent=5 // pred_check
        _
      $region58: #{tpu_custom_call.1} parent=5 // pred_check_branch
        %395 = sbr.rel (%p392) target = $region60
      $region59: #{tpu_custom_call.1} parent=5 // pred_region
        %s396 = ssub.s32 %s19, 1
        %p397 = scmp.lt.s32.totalorder %s28, 1
        %s398 = scalar_select %p397, %s28, 1
        %p399 = scmp.lt.s32.totalorder %s29, 0
        %s400 = scalar_select %p399, %s29, 0
        %s401 = sadd.s32 %s400, %s398
        %s402 = smul.addr %s401, 4
        %s403 = scalar_lea.vmem %s0, %s402
        %p404 = pneg %p59
        %p405 = pneg %p56
        %p406 = pneg %p80
        %p407 = pneg %p77
        %p408 = scmp.lt.s32.totalorder %s28, 1
        %s409 = scalar_select %p408, %s28, 1
        %s410 = smul.addr %s409, 4
        %s411 = smul.addr %s410, 8
        %s412 = scalar_lea.vmem %s2, %s411
        %p413 = pneg %p106
        %p414 = pneg %p103
        %p415 = scmp.lt.s32.totalorder %s28, 1
        %s416 = scalar_select %p415, %s28, 1
        %s417 = smul.addr %s416, 4
        %s418 = smul.addr %s417, 8
        %s419 = scalar_lea.vmem %s3, %s418
        %p420 = pneg %p132
        %p421 = pneg %p129
        %p422 = pneg %p153
        %p423 = pneg %p150
        %p424 = scmp.lt.s32.totalorder %s28, 1
        %s425 = scalar_select %p424, %s28, 1
        %s426 = smul.addr %s425, 4
        %s427 = smul.addr %s426, 8
        %s428 = scalar_lea.vmem %s5, %s427
        %p429 = pneg %p179
        %p430 = pneg %p176
        %p431 = scmp.lt.s32.totalorder %s28, 1
        %s432 = scalar_select %p431, %s28, 1
        %s433 = smul.addr %s432, 4
        %s434 = smul.addr %s433, 8
        %s435 = scalar_lea.vmem %s6, %s434
        %p436 = pneg %p205
        %p437 = pneg %p202
        %p438 = pneg %p226
        %p439 = pneg %p223
        %p440 = scmp.lt.s32.totalorder %s28, 1
        %s441 = scalar_select %p440, %s28, 1
        %s442 = smul.addr %s441, 4
        %s443 = scalar_lea.vmem %s8, %s442
        %p444 = pneg %p252
        %p445 = pneg %p249
        %p446 = scmp.lt.s32.totalorder %s28, 1
        %s447 = scalar_select %p446, %s28, 1
        %s448 = smul.addr %s447, 4
        %s449 = scalar_lea.vmem %s9, %s448
        %p450 = pneg %p278
        %p451 = pneg %p275
        %p452 = pneg %p306
        %p453 = pneg %p303
        %s454 = sand.u32 %s293, 1
        %s455 = scalar_lea.sflag [#allocation3], %s454
        %s456 = sand.u32 %s293, 1
        %s457 = smul.addr %s456, 4
        %s458 = scalar_lea.vmem [#allocation2], %s457
        %p459 = scmp.lt.s32.totalorder %s28, 1
        %s460 = scalar_select %p459, %s28, 1
        %p461 = scmp.lt.s32.totalorder %s29, 0
        %s462 = scalar_select %p461, %s29, 0
        %s463 = sadd.s32 %s462, %s460
        %s464 = smul.addr %s463, 4
        %s465 = scalar_lea.vmem %s0, %s464
        %p466 = scmp.lt.s32.totalorder %s28, 1
        %s467 = scalar_select %p466, %s28, 1
        %s468 = smul.addr %s467, 4
        %s469 = smul.addr %s468, 8
        %s470 = scalar_lea.vmem %s2, %s469
        %p471 = scmp.lt.s32.totalorder %s28, 1
        %s472 = scalar_select %p471, %s28, 1
        %s473 = smul.addr %s472, 4
        %s474 = smul.addr %s473, 8
        %s475 = scalar_lea.vmem %s3, %s474
        %p476 = scmp.lt.s32.totalorder %s28, 1
        %s477 = scalar_select %p476, %s28, 1
        %s478 = smul.addr %s477, 4
        %s479 = smul.addr %s478, 8
        %s480 = scalar_lea.vmem %s5, %s479
        %p481 = scmp.lt.s32.totalorder %s28, 1
        %s482 = scalar_select %p481, %s28, 1
        %s483 = smul.addr %s482, 4
        %s484 = smul.addr %s483, 8
        %s485 = scalar_lea.vmem %s6, %s484
        %p486 = scmp.lt.s32.totalorder %s28, 1
        %s487 = scalar_select %p486, %s28, 1
        %s488 = smul.addr %s487, 4
        %s489 = scalar_lea.vmem %s8, %s488
        %p490 = scmp.lt.s32.totalorder %s28, 1
        %s491 = scalar_select %p490, %s28, 1
        %s492 = smul.addr %s491, 4
        %s493 = scalar_lea.vmem %s9, %s492
        %v494 = vld [vmem:[%s465] sm:$0xf]
        %v495 = vand.u32 2147483647, %v494
        %vm496 = vcmp.le.f32.partialorder %v495, 0.7853982
        %vm497 = vcmp.lt.s32.totalorder %v494, 0
        %v498 = vand.u32 %v494, 2139095040
        %v499 = vshrl.u32 %v498, 23
        %v500 = vsub.s32 %v499, 127
        %v501 = vand.u32 2147483647, %v494
        %v502 = vand.u32 %v501, 8388607
        %v503 = vor.u32 %v502, 8388608
        %v504 = vsub.s32 0, %v503
        %v505 = vadd.s32 %v500, 1
        %vm506 = vcmp.gt.s32.totalorder %v505, 0
        %v507 = vsel %vm506, %v505, 0
        %v508 = vshrl.u32 %v507, 5
        %v509 = vand.u32 %v507, 31
        %v510 = vsub.s32 32, %v509
        %v511 = vshrl.u32 683565275, %v510
        %v512 = vshll.u32 683565275, %v509
        %v513 = vshrl.u32 2475754826, %v510
        %v514 = vor.u32 %v512, %v513
        %v515 = vshll.u32 2475754826, %v509
        %v516 = vshrl.u32 2131351028, %v510
        %v517 = vor.u32 %v515, %v516
        %v518 = vshll.u32 2131351028, %v509
        %v519 = vshrl.u32 2102212464, %v510
        %v520 = vor.u32 %v518, %v519
        %v521 = vshll.u32 2102212464, %v509
        %v522 = vshrl.u32 920167782, %v510
        %v523 = vor.u32 %v521, %v522
        %v524 = vshll.u32 920167782, %v509
        %v525 = vshrl.u32 1326507024, %v510
        %v526 = vor.u32 %v524, %v525
        %vm527 = vcmp.lt.s32.totalorder %v508, 1
        %vm528 = vcmp.lt.s32.totalorder %v508, 2
        %vm529 = vcmp.lt.s32.totalorder %v508, 3
        %vm530 = vcmp.lt.s32.totalorder %v508, 4
        %v531 = vsel %vm527, %v511, %v514
        %v532 = vsel %vm530, %v520, 2102212464
        %v533 = vsel %vm529, %v517, %v532
        %v534 = vsel %vm528, %v531, %v533
        %v535 = vsel %vm527, %v514, %v517
        %v536 = vsel %vm530, %v523, 920167782
        %v537 = vsel %vm529, %v520, %v536
        %v538 = vsel %vm528, %v535, %v537
        %v539 = vsel %vm527, %v517, %v520
        %v540 = vsel %vm530, %v526, 1326507024
        %v541 = vsel %vm529, %v523, %v540
        %v542 = vsel %vm528, %v539, %v541
        %v543 = vshll.u32 %v503, 8
        %v544 = vmul.u32.u64.compose %v543, %v542
        %v545 = vextract.low.u32 %v544
        %v546 = vextract.high.u32 %v544
        %v547 = vmul.u32.u64.compose %v543, %v538
        %v548 = vextract.low.u32 %v547
        %v549 = vextract.high.u32 %v547
        %v550 = vmul.u32 %v543, %v534
        %v551 = vadd.s32 %v546, %v548
        %vm552 = vc.u32 %v546, %v548
        %v553 = vadd.s32 %v549, 1
        %v554 = vsel %vm552, %v553, %v549
        %v555 = vadd.s32 %v550, %v554
        %v556 = vadd.s32 %v555, 536870912
        %v557 = vshrl.u32 %v556, 30
        %v558 = vshll.u32 %v557, 30
        %v559 = vsub.s32 %v555, %v558
        %vm560 = vcmp.lt.s32.totalorder %v559, 0
        %v561 = vsub.s32 0, %v559
        %v562 = vsel %vm560, %v561, %v559
        %v563 = vclz %v562
        %v564 = vsub.s32 %v563, 2
        %vm565 = vcmp.gt.s32.totalorder 0, %v564
        %v566 = vsel %vm565, 0, %v564
        %v567 = vsub.s32 32, %v566
        %v568 = vshll.u32 %v559, %v566
        %v569 = vshrl.u32 %v551, %v567
        %v570 = vor.u32 %v568, %v569
        %v571 = vsub.s32 4294967266, %v566
        %v572 = vadd.s32 %v571, 127
        %v573 = vshll.u32 %v572, 23
        %v574 = vor.u32 4788187, %v573
        %v575 = vand.u32 2147483647, %v574
        %v577 = vcvt.s32.f32 %v570
        %v578 = vmul.f32 %v577, %v575
        %v579 = vxor.u32 %v578, 2147483648
        %v580 = vsel %vm497, %v579, %v578
        %v581 = vsub.s32 4, %v557
        %v582 = vsel %vm497, %v581, %v557
        %v583 = vsel %vm496, %v494, %v580
        %v584 = vsel %vm496, 0, %v582
        %v585 = vcosq.f32.pop %v583
        %v586 = vsinq.f32.pop %v583
        %vm587 = vweird.f32 %v494
        %v588 = vadd.s32 %v584, 3
        %v589 = vand.u32 %v588, 3
        %vm590 = vcmp.lt.s32.totalorder %v589, 2
        %vm591 = vcmp.eq.s32.totalorder %v589, 0
        %v592 = vxor.u32 %v586, 2147483648
        %v593 = vsel %vm591, %v585, %v592
        %vm594 = vcmp.eq.s32.totalorder %v589, 2
        %v595 = vxor.u32 %v585, 2147483648
        %v596 = vsel %vm594, %v595, %v586
        %v597 = vsel %vm590, %v593, %v596
        %v598 = vsel %vm587, nan, %v597
        %v599 = vand.u32 2147483647, %v494
        %vm600 = vcmp.le.f32.partialorder %v599, 0.7853982
        %vm601 = vcmp.lt.s32.totalorder %v494, 0
        %v602 = vand.u32 %v494, 2139095040
        %v603 = vshrl.u32 %v602, 23
        %v604 = vsub.s32 %v603, 127
        %v605 = vand.u32 2147483647, %v494
        %v606 = vand.u32 %v605, 8388607
        %v607 = vor.u32 %v606, 8388608
        %v608 = vsub.s32 0, %v607
        %v609 = vadd.s32 %v604, 1
        %vm610 = vcmp.gt.s32.totalorder %v609, 0
        %v611 = vsel %vm610, %v609, 0
        %v612 = vshrl.u32 %v611, 5
        %v613 = vand.u32 %v611, 31
        %v614 = vsub.s32 32, %v613
        %v615 = vshrl.u32 683565275, %v614
        %v616 = vshll.u32 683565275, %v613
        %v617 = vshrl.u32 2475754826, %v614
        %v618 = vor.u32 %v616, %v617
        %v619 = vshll.u32 2475754826, %v613
        %v620 = vshrl.u32 2131351028, %v614
        %v621 = vor.u32 %v619, %v620
        %v622 = vshll.u32 2131351028, %v613
        %v623 = vshrl.u32 2102212464, %v614
        %v624 = vor.u32 %v622, %v623
        %v625 = vshll.u32 2102212464, %v613
        %v626 = vshrl.u32 920167782, %v614
        %v627 = vor.u32 %v625, %v626
        %v628 = vshll.u32 920167782, %v613
        %v629 = vshrl.u32 1326507024, %v614
        %v630 = vor.u32 %v628, %v629
        %vm631 = vcmp.lt.s32.totalorder %v612, 1
        %vm632 = vcmp.lt.s32.totalorder %v612, 2
        %vm633 = vcmp.lt.s32.totalorder %v612, 3
        %vm634 = vcmp.lt.s32.totalorder %v612, 4
        %v635 = vsel %vm631, %v615, %v618
        %v636 = vsel %vm634, %v624, 2102212464
        %v637 = vsel %vm633, %v621, %v636
        %v638 = vsel %vm632, %v635, %v637
        %v639 = vsel %vm631, %v618, %v621
        %v640 = vsel %vm634, %v627, 920167782
        %v641 = vsel %vm633, %v624, %v640
        %v642 = vsel %vm632, %v639, %v641
        %v643 = vsel %vm631, %v621, %v624
        %v644 = vsel %vm634, %v630, 1326507024
        %v645 = vsel %vm633, %v627, %v644
        %v646 = vsel %vm632, %v643, %v645
        %v647 = vshll.u32 %v607, 8
        %v648 = vmul.u32.u64.compose %v647, %v646
        %v649 = vextract.low.u32 %v648
        %v650 = vextract.high.u32 %v648
        %v651 = vmul.u32.u64.compose %v647, %v642
        %v652 = vextract.low.u32 %v651
        %v653 = vextract.high.u32 %v651
        %v654 = vmul.u32 %v647, %v638
        %v655 = vadd.s32 %v650, %v652
        %vm656 = vc.u32 %v650, %v652
        %v657 = vadd.s32 %v653, 1
        %v658 = vsel %vm656, %v657, %v653
        %v659 = vadd.s32 %v654, %v658
        %v660 = vadd.s32 %v659, 536870912
        %v661 = vshrl.u32 %v660, 30
        %v662 = vshll.u32 %v661, 30
        %v663 = vsub.s32 %v659, %v662
        %vm664 = vcmp.lt.s32.totalorder %v663, 0
        %v665 = vsub.s32 0, %v663
        %v666 = vsel %vm664, %v665, %v663
        %v667 = vclz %v666
        %v668 = vsub.s32 %v667, 2
        %vm669 = vcmp.gt.s32.totalorder 0, %v668
        %v670 = vsel %vm669, 0, %v668
        %v671 = vsub.s32 32, %v670
        %v672 = vshll.u32 %v663, %v670
        %v673 = vshrl.u32 %v655, %v671
        %v674 = vor.u32 %v672, %v673
        %v675 = vsub.s32 4294967266, %v670
        %v676 = vadd.s32 %v675, 127
        %v677 = vshll.u32 %v676, 23
        %v678 = vor.u32 4788187, %v677
        %v679 = vand.u32 2147483647, %v678
        %v681 = vcvt.s32.f32 %v674
        %v682 = vmul.f32 %v681, %v679
        %v683 = vxor.u32 %v682, 2147483648
        %v684 = vsel %vm601, %v683, %v682
        %v685 = vsub.s32 4, %v661
        %v686 = vsel %vm601, %v685, %v661
        %v687 = vsel %vm600, %v494, %v684
        %v688 = vsel %vm600, 0, %v686
        %v689 = vcosq.f32.pop %v687
        %v690 = vsinq.f32.pop %v687
        %vm691 = vweird.f32 %v494
        %v692 = vand.u32 %v688, 3
        %vm693 = vcmp.lt.s32.totalorder %v692, 2
        %vm694 = vcmp.eq.s32.totalorder %v692, 0
        %v695 = vxor.u32 %v690, 2147483648
        %v696 = vsel %vm694, %v689, %v695
        %vm697 = vcmp.eq.s32.totalorder %v692, 2
        %v698 = vxor.u32 %v689, 2147483648
        %v699 = vsel %vm697, %v698, %v690
        %v700 = vsel %vm693, %v696, %v699
        %v701 = vsel %vm691, nan, %v700
        %v702 = vmul.f32 %v494, 2.0
        %v703 = vand.u32 2147483647, %v702
        %vm704 = vcmp.le.f32.partialorder %v703, 0.7853982
        %vm705 = vcmp.lt.s32.totalorder %v702, 0
        %v706 = vand.u32 %v702, 2139095040
        %v707 = vshrl.u32 %v706, 23
        %v708 = vsub.s32 %v707, 127
        %v709 = vand.u32 2147483647, %v702
        %v710 = vand.u32 %v709, 8388607
        %v711 = vor.u32 %v710, 8388608
        %v712 = vsub.s32 0, %v711
        %v713 = vadd.s32 %v708, 1
        %vm714 = vcmp.gt.s32.totalorder %v713, 0
        %v715 = vsel %vm714, %v713, 0
        %v716 = vshrl.u32 %v715, 5
        %v717 = vand.u32 %v715, 31
        %v718 = vsub.s32 32, %v717
        %v719 = vshrl.u32 683565275, %v718
        %v720 = vshll.u32 683565275, %v717
        %v721 = vshrl.u32 2475754826, %v718
        %v722 = vor.u32 %v720, %v721
        %v723 = vshll.u32 2475754826, %v717
        %v724 = vshrl.u32 2131351028, %v718
        %v725 = vor.u32 %v723, %v724
        %v726 = vshll.u32 2131351028, %v717
        %v727 = vshrl.u32 2102212464, %v718
        %v728 = vor.u32 %v726, %v727
        %v729 = vshll.u32 2102212464, %v717
        %v730 = vshrl.u32 920167782, %v718
        %v731 = vor.u32 %v729, %v730
        %v732 = vshll.u32 920167782, %v717
        %v733 = vshrl.u32 1326507024, %v718
        %v734 = vor.u32 %v732, %v733
        %vm735 = vcmp.lt.s32.totalorder %v716, 1
        %vm736 = vcmp.lt.s32.totalorder %v716, 2
        %vm737 = vcmp.lt.s32.totalorder %v716, 3
        %vm738 = vcmp.lt.s32.totalorder %v716, 4
        %v739 = vsel %vm735, %v719, %v722
        %v740 = vsel %vm738, %v728, 2102212464
        %v741 = vsel %vm737, %v725, %v740
        %v742 = vsel %vm736, %v739, %v741
        %v743 = vsel %vm735, %v722, %v725
        %v744 = vsel %vm738, %v731, 920167782
        %v745 = vsel %vm737, %v728, %v744
        %v746 = vsel %vm736, %v743, %v745
        %v747 = vsel %vm735, %v725, %v728
        %v748 = vsel %vm738, %v734, 1326507024
        %v749 = vsel %vm737, %v731, %v748
        %v750 = vsel %vm736, %v747, %v749
        %v751 = vshll.u32 %v711, 8
        %v752 = vmul.u32.u64.compose %v751, %v750
        %v753 = vextract.low.u32 %v752
        %v754 = vextract.high.u32 %v752
        %v755 = vmul.u32.u64.compose %v751, %v746
        %v756 = vextract.low.u32 %v755
        %v757 = vextract.high.u32 %v755
        %v758 = vmul.u32 %v751, %v742
        %v759 = vadd.s32 %v754, %v756
        %vm760 = vc.u32 %v754, %v756
        %v761 = vadd.s32 %v757, 1
        %v762 = vsel %vm760, %v761, %v757
        %v763 = vadd.s32 %v758, %v762
        %v764 = vadd.s32 %v763, 536870912
        %v765 = vshrl.u32 %v764, 30
        %v766 = vshll.u32 %v765, 30
        %v767 = vsub.s32 %v763, %v766
        %vm768 = vcmp.lt.s32.totalorder %v767, 0
        %v769 = vsub.s32 0, %v767
        %v770 = vsel %vm768, %v769, %v767
        %v771 = vclz %v770
        %v772 = vsub.s32 %v771, 2
        %vm773 = vcmp.gt.s32.totalorder 0, %v772
        %v774 = vsel %vm773, 0, %v772
        %v775 = vsub.s32 32, %v774
        %v776 = vshll.u32 %v767, %v774
        %v777 = vshrl.u32 %v759, %v775
        %v778 = vor.u32 %v776, %v777
        %v779 = vsub.s32 4294967266, %v774
        %v780 = vadd.s32 %v779, 127
        %v781 = vshll.u32 %v780, 23
        %v782 = vor.u32 4788187, %v781
        %v783 = vand.u32 2147483647, %v782
        %v785 = vcvt.s32.f32 %v778
        %v786 = vmul.f32 %v785, %v783
        %v787 = vxor.u32 %v786, 2147483648
        %v788 = vsel %vm705, %v787, %v786
        %v789 = vsub.s32 4, %v765
        %v790 = vsel %vm705, %v789, %v765
        %v791 = vsel %vm704, %v702, %v788
        %v792 = vsel %vm704, 0, %v790
        %v793 = vcosq.f32.pop %v791
        %v794 = vsinq.f32.pop %v791
        %vm795 = vweird.f32 %v702
        %v796 = vadd.s32 %v792, 3
        %v797 = vand.u32 %v796, 3
        %vm798 = vcmp.lt.s32.totalorder %v797, 2
        %vm799 = vcmp.eq.s32.totalorder %v797, 0
        %v800 = vxor.u32 %v794, 2147483648
        %v801 = vsel %vm799, %v793, %v800
        %vm802 = vcmp.eq.s32.totalorder %v797, 2
        %v803 = vxor.u32 %v793, 2147483648
        %v804 = vsel %vm802, %v803, %v794
        %v805 = vsel %vm798, %v801, %v804
        %v806 = vsel %vm795, nan, %v805
        %v807 = vand.u32 2147483647, %v702
        %vm808 = vcmp.le.f32.partialorder %v807, 0.7853982
        %vm809 = vcmp.lt.s32.totalorder %v702, 0
        %v810 = vand.u32 %v702, 2139095040
        %v811 = vshrl.u32 %v810, 23
        %v812 = vsub.s32 %v811, 127
        %v813 = vand.u32 2147483647, %v702
        %v814 = vand.u32 %v813, 8388607
        %v815 = vor.u32 %v814, 8388608
        %v816 = vsub.s32 0, %v815
        %v817 = vadd.s32 %v812, 1
        %vm818 = vcmp.gt.s32.totalorder %v817, 0
        %v819 = vsel %vm818, %v817, 0
        %v820 = vshrl.u32 %v819, 5
        %v821 = vand.u32 %v819, 31
        %v822 = vsub.s32 32, %v821
        %v823 = vshrl.u32 683565275, %v822
        %v824 = vshll.u32 683565275, %v821
        %v825 = vshrl.u32 2475754826, %v822
        %v826 = vor.u32 %v824, %v825
        %v827 = vshll.u32 2475754826, %v821
        %v828 = vshrl.u32 2131351028, %v822
        %v829 = vor.u32 %v827, %v828
        %v830 = vshll.u32 2131351028, %v821
        %v831 = vshrl.u32 2102212464, %v822
        %v832 = vor.u32 %v830, %v831
        %v833 = vshll.u32 2102212464, %v821
        %v834 = vshrl.u32 920167782, %v822
        %v835 = vor.u32 %v833, %v834
        %v836 = vshll.u32 920167782, %v821
        %v837 = vshrl.u32 1326507024, %v822
        %v838 = vor.u32 %v836, %v837
        %vm839 = vcmp.lt.s32.totalorder %v820, 1
        %vm840 = vcmp.lt.s32.totalorder %v820, 2
        %vm841 = vcmp.lt.s32.totalorder %v820, 3
        %vm842 = vcmp.lt.s32.totalorder %v820, 4
        %v843 = vsel %vm839, %v823, %v826
        %v844 = vsel %vm842, %v832, 2102212464
        %v845 = vsel %vm841, %v829, %v844
        %v846 = vsel %vm840, %v843, %v845
        %v847 = vsel %vm839, %v826, %v829
        %v848 = vsel %vm842, %v835, 920167782
        %v849 = vsel %vm841, %v832, %v848
        %v850 = vsel %vm840, %v847, %v849
        %v851 = vsel %vm839, %v829, %v832
        %v852 = vsel %vm842, %v838, 1326507024
        %v853 = vsel %vm841, %v835, %v852
        %v854 = vsel %vm840, %v851, %v853
        %v855 = vshll.u32 %v815, 8
        %v856 = vmul.u32.u64.compose %v855, %v854
        %v857 = vextract.low.u32 %v856
        %v858 = vextract.high.u32 %v856
        %v859 = vmul.u32.u64.compose %v855, %v850
        %v860 = vextract.low.u32 %v859
        %v861 = vextract.high.u32 %v859
        %v862 = vmul.u32 %v855, %v846
        %v863 = vadd.s32 %v858, %v860
        %vm864 = vc.u32 %v858, %v860
        %v865 = vadd.s32 %v861, 1
        %v866 = vsel %vm864, %v865, %v861
        %v867 = vadd.s32 %v862, %v866
        %v868 = vadd.s32 %v867, 536870912
        %v869 = vshrl.u32 %v868, 30
        %v870 = vshll.u32 %v869, 30
        %v871 = vsub.s32 %v867, %v870
        %vm872 = vcmp.lt.s32.totalorder %v871, 0
        %v873 = vsub.s32 0, %v871
        %v874 = vsel %vm872, %v873, %v871
        %v875 = vclz %v874
        %v876 = vsub.s32 %v875, 2
        %vm877 = vcmp.gt.s32.totalorder 0, %v876
        %v878 = vsel %vm877, 0, %v876
        %v879 = vsub.s32 32, %v878
        %v880 = vshll.u32 %v871, %v878
        %v881 = vshrl.u32 %v863, %v879
        %v882 = vor.u32 %v880, %v881
        %v883 = vsub.s32 4294967266, %v878
        %v884 = vadd.s32 %v883, 127
        %v885 = vshll.u32 %v884, 23
        %v886 = vor.u32 4788187, %v885
        %v887 = vand.u32 2147483647, %v886
        %v889 = vcvt.s32.f32 %v882
        %v890 = vmul.f32 %v889, %v887
        %v891 = vxor.u32 %v890, 2147483648
        %v892 = vsel %vm809, %v891, %v890
        %v893 = vsub.s32 4, %v869
        %v894 = vsel %vm809, %v893, %v869
        %v895 = vsel %vm808, %v702, %v892
        %v896 = vsel %vm808, 0, %v894
        %v897 = vcosq.f32.pop %v895
        %v898 = vsinq.f32.pop %v895
        %vm899 = vweird.f32 %v702
        %v900 = vand.u32 %v896, 3
        %vm901 = vcmp.lt.s32.totalorder %v900, 2
        %vm902 = vcmp.eq.s32.totalorder %v900, 0
        %v903 = vxor.u32 %v898, 2147483648
        %v904 = vsel %vm902, %v897, %v903
        %vm905 = vcmp.eq.s32.totalorder %v900, 2
        %v906 = vxor.u32 %v897, 2147483648
        %v907 = vsel %vm905, %v906, %v898
        %v908 = vsel %vm901, %v904, %v907
        %v909 = vsel %vm899, nan, %v908
        %v911 = vrot.slane %v598, 4
        %v914 = vrot.slane %v806, 4
        %vm916 = vcmask 1043456
        %v917 = vsel %vm916, %v494, %v911
        %v918 = vsel %vm916, %v701, %v914
        %v919 = vld [vmem:[%s1] sm:$0xff]
        %v920 = vld [vmem:[%s1 + $0x8] sm:$0xff]
        %v921 = vld [vmem:[%s1 + $0x10] sm:$0xff]
        %v922 = vld [vmem:[%s1 + $0x18] sm:$0xff]
        %v923 = vld [vmem:[%s470] sm:$0xff]
        %v924 = vld [vmem:[%s470 + $0x8] sm:$0xff]
        %v925 = vld [vmem:[%s470 + $0x10] sm:$0xff]
        %v926 = vld [vmem:[%s470 + $0x18] sm:$0xff]
        %v927 = vld [vmem:[%s475] sm:$0xff]
        %v928 = vld [vmem:[%s475 + $0x8] sm:$0xff]
        %v929 = vld [vmem:[%s475 + $0x10] sm:$0xff]
        %v930 = vld [vmem:[%s475 + $0x18] sm:$0xff]
        %vm931 = vcmask 162816
        %v933 = vsel %vm931, %v919, 0
        %v936 = vsel %vm931, %v920, 0
        %v939 = vsel %vm931, %v921, 0
        %v942 = vsel %vm931, %v922, 0
        %v945 = vsel %vm916, %v909, 0
        %947 = vmatprep.subr.mxu0 0.0
        %948 = vmatpush1.msra.mxu0 %v917
        %949 = vmatprep.subr.mxu0 0.0
        %950 = vmatpush1.msra.mxu0 %v918
        %951 = vmatprep.subr.mxu0 0.0
        %952 = vmatpush1.msra.mxu0 %v945
        %953 = vmatprep.subr.mxu0 0.0
        %954 = vmatpush1.msra.mxu0 0.0
        %955 = vmatprep.subr.mxu0 0.0
        %956 = vmatpush1.msra.mxu0 0.0
        %957 = vmatprep.subr.mxu0 0.0
        %958 = vmatpush1.msra.mxu0 0.0
        %959 = vmatprep.subr.mxu0 0.0
        %960 = vmatpush1.msra.mxu0 0.0
        %961 = vmatprep.subr.mxu0 0.0
        %962 = vmatpush1.msra.mxu0 0.0
        %963 = vmatprep.subr.mxu0 0.0
        %964 = vmatpush1.msra.mxu0 0.0
        %965 = vmatprep.subr.mxu0 0.0
        %966 = vmatpush1.msra.mxu0 0.0
        %967 = vmatprep.subr.mxu0 0.0
        %968 = vmatpush1.msra.mxu0 0.0
        %969 = vmatprep.subr.mxu0 0.0
        %970 = vmatpush1.msra.mxu0 0.0
        %971 = vmatprep.subr.mxu0 0.0
        %972 = vmatpush1.msra.mxu0 0.0
        %973 = vmatprep.subr.mxu0 0.0
        %974 = vmatpush1.msra.mxu0 0.0
        %975 = vmatprep.subr.mxu0 0.0
        %976 = vmatpush1.msra.mxu0 0.0
        %977 = vmatprep.subr.mxu0 0.0
        %978 = vmatpush1.msra.mxu0 0.0
        %979 = vmatprep.subr.mxu0 0.0
        %980 = vmatpush1.msra.mxu0 0.0
        %981 = vmatprep.subr.mxu0 0.0
        %982 = vmatpush1.msra.mxu0 0.0
        %983 = vmatprep.subr.mxu0 0.0
        %984 = vmatpush1.msra.mxu0 0.0
        %985 = vmatprep.subr.mxu0 0.0
        %986 = vmatpush1.msra.mxu0 0.0
        %987 = vmatprep.subr.mxu0 0.0
        %988 = vmatpush1.msra.mxu0 0.0
        %989 = vmatprep.subr.mxu0 0.0
        %990 = vmatpush1.msra.mxu0 0.0
        %991 = vmatprep.subr.mxu0 0.0
        %992 = vmatpush1.msra.mxu0 0.0
        %993 = vmatprep.subr.mxu0 0.0
        %994 = vmatpush1.msra.mxu0 0.0
        %995 = vmatprep.subr.mxu0 0.0
        %996 = vmatpush1.msra.mxu0 0.0
        %997 = vmatprep.subr.mxu0 0.0
        %998 = vmatpush1.msra.mxu0 0.0
        %999 = vmatprep.subr.mxu0 0.0
        %1000 = vmatpush1.msra.mxu0 0.0
        %1001 = vmatprep.subr.mxu0 0.0
        %1002 = vmatpush1.msra.mxu0 0.0
        %1003 = vmatprep.subr.mxu0 0.0
        %1004 = vmatpush1.msra.mxu0 0.0
        %1005 = vmatprep.subr.mxu0 0.0
        %1006 = vmatpush1.msra.mxu0 0.0
        %1007 = vmatprep.subr.mxu0 0.0
        %1008 = vmatpush1.msra.mxu0 0.0
        %1009 = vmatprep.subr.mxu0 0.0
        %1010 = vmatpush1.msra.mxu0 0.0
        %1011 = vmatprep.mubr.f32.mxu0 0.0
        %1012 = vmatmul.mubr.f32.gmra.mrb[0].mxu0 %v933
        %v1013 = vpop.f32.mrb[0].mxu0
        %v1014 = vadd.f32 0.0, %v1013
        %v1015 = vpop.f32.mrb[0].mxu0
        %1016 = vmatprep.mubr.f32.mxu0 0.0
        %1017 = vmatmul.mubr.f32.gmra.mrb[0].mxu0 %v936
        %v1018 = vpop.f32.mrb[0].mxu0
        %v1019 = vadd.f32 0.0, %v1018
        %v1020 = vpop.f32.mrb[0].mxu0
        %1021 = vmatprep.mubr.f32.mxu0 0.0
        %1022 = vmatmul.mubr.f32.gmra.mrb[0].mxu0 %v939
        %v1023 = vpop.f32.mrb[0].mxu0
        %v1024 = vadd.f32 0.0, %v1023
        %v1025 = vpop.f32.mrb[0].mxu0
        %1026 = vmatprep.mubr.f32.mxu0 0.0
        %1027 = vmatmul.mubr.f32.gmra.mrb[0].mxu0 %v942
        %v1028 = vpop.f32.mrb[0].mxu0
        %v1029 = vadd.f32 0.0, %v1028
        %v1030 = vpop.f32.mrb[0].mxu0
        %1031 = vdwg.mxu0
        %1033 = vset.pattern.permute.xlu0 0
        %1034 = vperm.xlu0 %1033, %v923
        %v1035 = vpop.permute.xlu0 %1034
        %1038 = vset.pattern.permute.xlu0 0
        %1039 = vperm.xlu0 %1038, %v924
        %v1040 = vpop.permute.xlu0 %1039
        %1043 = vset.pattern.permute.xlu0 0
        %1044 = vperm.xlu0 %1043, %v925
        %v1045 = vpop.permute.xlu0 %1044
        %1048 = vset.pattern.permute.xlu0 0
        %1049 = vperm.xlu0 %1048, %v926
        %v1050 = vpop.permute.xlu0 %1049
        %v1052 = vmul.f32 %v1035, %v1014
        %v1053 = vmul.f32 %v1040, %v1019
        %v1054 = vmul.f32 %v1045, %v1024
        %v1055 = vmul.f32 %v1050, %v1029
        %1057 = vset.pattern.permute.xlu0 0
        %1058 = vperm.xlu0 %1057, %v927
        %v1059 = vpop.permute.xlu0 %1058
        %1062 = vset.pattern.permute.xlu0 0
        %1063 = vperm.xlu0 %1062, %v928
        %v1064 = vpop.permute.xlu0 %1063
        %1067 = vset.pattern.permute.xlu0 0
        %1068 = vperm.xlu0 %1067, %v929
        %v1069 = vpop.permute.xlu0 %1068
        %1072 = vset.pattern.permute.xlu0 0
        %1073 = vperm.xlu0 %1072, %v930
        %v1074 = vpop.permute.xlu0 %1073
        %v1076 = vadd.f32 %v1052, %v1059
        %v1077 = vadd.f32 %v1053, %v1064
        %v1078 = vadd.f32 %v1054, %v1069
        %v1079 = vadd.f32 %v1055, %v1074
        %v1080 = vtanh.pop %v1076
        %v1081 = vtanh.pop %v1077
        %v1082 = vtanh.pop %v1078
        %v1083 = vtanh.pop %v1079
        %v1084 = vld [vmem:[%s4] sm:$0xff]
        %v1085 = vld [vmem:[%s4 + $0x8] sm:$0xff]
        %v1086 = vld [vmem:[%s4 + $0x10] sm:$0xff]
        %v1087 = vld [vmem:[%s4 + $0x18] sm:$0xff]
        %v1088 = vld [vmem:[%s480] sm:$0xff]
        %v1089 = vld [vmem:[%s480 + $0x8] sm:$0xff]
        %v1090 = vld [vmem:[%s480 + $0x10] sm:$0xff]
        %v1091 = vld [vmem:[%s480 + $0x18] sm:$0xff]
        %v1092 = vld [vmem:[%s485] sm:$0xff]
        %v1093 = vld [vmem:[%s485 + $0x8] sm:$0xff]
        %v1094 = vld [vmem:[%s485 + $0x10] sm:$0xff]
        %v1095 = vld [vmem:[%s485 + $0x18] sm:$0xff]
        %vm1096 = vcmask 261120
        %v1098 = vsel %vm1096, %v1084, 0
        %v1101 = vsel %vm1096, %v1085, 0
        %v1104 = vsel %vm1096, %v1086, 0
        %v1107 = vsel %vm1096, %v1087, 0
        %1109 = vmatprep.subr.mxu0 0.0
        %1110 = vmatpush1.msra.mxu0 %v1080
        %1111 = vmatprep.subr.mxu0 0.0
        %1112 = vmatpush1.msra.mxu0 %v1081
        %1113 = vmatprep.subr.mxu0 0.0
        %1114 = vmatpush1.msra.mxu0 %v1082
        %1115 = vmatprep.subr.mxu0 0.0
        %1116 = vmatpush1.msra.mxu0 %v1083
        %1117 = vmatprep.subr.mxu0 0.0
        %1118 = vmatpush1.msra.mxu0 0.0
        %1119 = vmatprep.subr.mxu0 0.0
        %1120 = vmatpush1.msra.mxu0 0.0
        %1121 = vmatprep.subr.mxu0 0.0
        %1122 = vmatpush1.msra.mxu0 0.0
        %1123 = vmatprep.subr.mxu0 0.0
        %1124 = vmatpush1.msra.mxu0 0.0
        %1125 = vmatprep.subr.mxu0 0.0
        %1126 = vmatpush1.msra.mxu0 0.0
        %1127 = vmatprep.subr.mxu0 0.0
        %1128 = vmatpush1.msra.mxu0 0.0
        %1129 = vmatprep.subr.mxu0 0.0
        %1130 = vmatpush1.msra.mxu0 0.0
        %1131 = vmatprep.subr.mxu0 0.0
        %1132 = vmatpush1.msra.mxu0 0.0
        %1133 = vmatprep.subr.mxu0 0.0
        %1134 = vmatpush1.msra.mxu0 0.0
        %1135 = vmatprep.subr.mxu0 0.0
        %1136 = vmatpush1.msra.mxu0 0.0
        %1137 = vmatprep.subr.mxu0 0.0
        %1138 = vmatpush1.msra.mxu0 0.0
        %1139 = vmatprep.subr.mxu0 0.0
        %1140 = vmatpush1.msra.mxu0 0.0
        %1141 = vmatprep.subr.mxu0 0.0
        %1142 = vmatpush1.msra.mxu0 0.0
        %1143 = vmatprep.subr.mxu0 0.0
        %1144 = vmatpush1.msra.mxu0 0.0
        %1145 = vmatprep.subr.mxu0 0.0
        %1146 = vmatpush1.msra.mxu0 0.0
        %1147 = vmatprep.subr.mxu0 0.0
        %1148 = vmatpush1.msra.mxu0 0.0
        %1149 = vmatprep.subr.mxu0 0.0
        %1150 = vmatpush1.msra.mxu0 0.0
        %1151 = vmatprep.subr.mxu0 0.0
        %1152 = vmatpush1.msra.mxu0 0.0
        %1153 = vmatprep.subr.mxu0 0.0
        %1154 = vmatpush1.msra.mxu0 0.0
        %1155 = vmatprep.subr.mxu0 0.0
        %1156 = vmatpush1.msra.mxu0 0.0
        %1157 = vmatprep.subr.mxu0 0.0
        %1158 = vmatpush1.msra.mxu0 0.0
        %1159 = vmatprep.subr.mxu0 0.0
        %1160 = vmatpush1.msra.mxu0 0.0
        %1161 = vmatprep.subr.mxu0 0.0
        %1162 = vmatpush1.msra.mxu0 0.0
        %1163 = vmatprep.subr.mxu0 0.0
        %1164 = vmatpush1.msra.mxu0 0.0
        %1165 = vmatprep.subr.mxu0 0.0
        %1166 = vmatpush1.msra.mxu0 0.0
        %1167 = vmatprep.subr.mxu0 0.0
        %1168 = vmatpush1.msra.mxu0 0.0
        %1169 = vmatprep.subr.mxu0 0.0
        %1170 = vmatpush1.msra.mxu0 0.0
        %1171 = vmatprep.subr.mxu0 0.0
        %1172 = vmatpush1.msra.mxu0 0.0
        %1173 = vmatprep.mubr.f32.mxu0 0.0
        %1174 = vmatmul.mubr.f32.gmra.mrb[0].mxu0 %v1098
        %v1175 = vpop.f32.mrb[0].mxu0
        %v1176 = vadd.f32 0.0, %v1175
        %v1177 = vpop.f32.mrb[0].mxu0
        %1178 = vmatprep.mubr.f32.mxu0 0.0
        %1179 = vmatmul.mubr.f32.gmra.mrb[0].mxu0 %v1101
        %v1180 = vpop.f32.mrb[0].mxu0
        %v1181 = vadd.f32 0.0, %v1180
        %v1182 = vpop.f32.mrb[0].mxu0
        %1183 = vmatprep.mubr.f32.mxu0 0.0
        %1184 = vmatmul.mubr.f32.gmra.mrb[0].mxu0 %v1104
        %v1185 = vpop.f32.mrb[0].mxu0
        %v1186 = vadd.f32 0.0, %v1185
        %v1187 = vpop.f32.mrb[0].mxu0
        %1188 = vmatprep.mubr.f32.mxu0 0.0
        %1189 = vmatmul.mubr.f32.gmra.mrb[0].mxu0 %v1107
        %v1190 = vpop.f32.mrb[0].mxu0
        %v1191 = vadd.f32 0.0, %v1190
        %v1192 = vpop.f32.mrb[0].mxu0
        %1193 = vdwg.mxu0
        %1195 = vset.pattern.permute.xlu0 0
        %1196 = vperm.xlu0 %1195, %v1088
        %v1197 = vpop.permute.xlu0 %1196
        %1200 = vset.pattern.permute.xlu0 0
        %1201 = vperm.xlu0 %1200, %v1089
        %v1202 = vpop.permute.xlu0 %1201
        %1205 = vset.pattern.permute.xlu0 0
        %1206 = vperm.xlu0 %1205, %v1090
        %v1207 = vpop.permute.xlu0 %1206
        %1210 = vset.pattern.permute.xlu0 0
        %1211 = vperm.xlu0 %1210, %v1091
        %v1212 = vpop.permute.xlu0 %1211
        %v1214 = vmul.f32 %v1197, %v1176
        %v1215 = vmul.f32 %v1202, %v1181
        %v1216 = vmul.f32 %v1207, %v1186
        %v1217 = vmul.f32 %v1212, %v1191
        %1219 = vset.pattern.permute.xlu0 0
        %1220 = vperm.xlu0 %1219, %v1092
        %v1221 = vpop.permute.xlu0 %1220
        %1224 = vset.pattern.permute.xlu0 0
        %1225 = vperm.xlu0 %1224, %v1093
        %v1226 = vpop.permute.xlu0 %1225
        %1229 = vset.pattern.permute.xlu0 0
        %1230 = vperm.xlu0 %1229, %v1094
        %v1231 = vpop.permute.xlu0 %1230
        %1234 = vset.pattern.permute.xlu0 0
        %1235 = vperm.xlu0 %1234, %v1095
        %v1236 = vpop.permute.xlu0 %1235
        %v1238 = vadd.f32 %v1214, %v1221
        %v1239 = vadd.f32 %v1215, %v1226
        %v1240 = vadd.f32 %v1216, %v1231
        %v1241 = vadd.f32 %v1217, %v1236
        %v1242 = vtanh.pop %v1238
        %v1243 = vtanh.pop %v1239
        %v1244 = vtanh.pop %v1240
        %v1245 = vtanh.pop %v1241
        %v1246 = vld [vmem:[%s7] sm:$0xf]
        %v1247 = vld [vmem:[%s489] sm:$0xf]
        %v1248 = vld [vmem:[%s493] sm:$0xf]
        %v1250 = vsel %vm1096, %v1246, 0
        %1252 = vmatprep.subr.mxu0 0.0
        %1253 = vmatpush1.msra.mxu0 %v1242
        %1254 = vmatprep.subr.mxu0 0.0
        %1255 = vmatpush1.msra.mxu0 %v1243
        %1256 = vmatprep.subr.mxu0 0.0
        %1257 = vmatpush1.msra.mxu0 %v1244
        %1258 = vmatprep.subr.mxu0 0.0
        %1259 = vmatpush1.msra.mxu0 %v1245
        %1260 = vmatprep.subr.mxu0 0.0
        %1261 = vmatpush1.msra.mxu0 0.0
        %1262 = vmatprep.subr.mxu0 0.0
        %1263 = vmatpush1.msra.mxu0 0.0
        %1264 = vmatprep.subr.mxu0 0.0
        %1265 = vmatpush1.msra.mxu0 0.0
        %1266 = vmatprep.subr.mxu0 0.0
        %1267 = vmatpush1.msra.mxu0 0.0
        %1268 = vmatprep.subr.mxu0 0.0
        %1269 = vmatpush1.msra.mxu0 0.0
        %1270 = vmatprep.subr.mxu0 0.0
        %1271 = vmatpush1.msra.mxu0 0.0
        %1272 = vmatprep.subr.mxu0 0.0
        %1273 = vmatpush1.msra.mxu0 0.0
        %1274 = vmatprep.subr.mxu0 0.0
        %1275 = vmatpush1.msra.mxu0 0.0
        %1276 = vmatprep.subr.mxu0 0.0
        %1277 = vmatpush1.msra.mxu0 0.0
        %1278 = vmatprep.subr.mxu0 0.0
        %1279 = vmatpush1.msra.mxu0 0.0
        %1280 = vmatprep.subr.mxu0 0.0
        %1281 = vmatpush1.msra.mxu0 0.0
        %1282 = vmatprep.subr.mxu0 0.0
        %1283 = vmatpush1.msra.mxu0 0.0
        %1284 = vmatprep.subr.mxu0 0.0
        %1285 = vmatpush1.msra.mxu0 0.0
        %1286 = vmatprep.subr.mxu0 0.0
        %1287 = vmatpush1.msra.mxu0 0.0
        %1288 = vmatprep.subr.mxu0 0.0
        %1289 = vmatpush1.msra.mxu0 0.0
        %1290 = vmatprep.subr.mxu0 0.0
        %1291 = vmatpush1.msra.mxu0 0.0
        %1292 = vmatprep.subr.mxu0 0.0
        %1293 = vmatpush1.msra.mxu0 0.0
        %1294 = vmatprep.subr.mxu0 0.0
        %1295 = vmatpush1.msra.mxu0 0.0
        %1296 = vmatprep.subr.mxu0 0.0
        %1297 = vmatpush1.msra.mxu0 0.0
        %1298 = vmatprep.subr.mxu0 0.0
        %1299 = vmatpush1.msra.mxu0 0.0
        %1300 = vmatprep.subr.mxu0 0.0
        %1301 = vmatpush1.msra.mxu0 0.0
        %1302 = vmatprep.subr.mxu0 0.0
        %1303 = vmatpush1.msra.mxu0 0.0
        %1304 = vmatprep.subr.mxu0 0.0
        %1305 = vmatpush1.msra.mxu0 0.0
        %1306 = vmatprep.subr.mxu0 0.0
        %1307 = vmatpush1.msra.mxu0 0.0
        %1308 = vmatprep.subr.mxu0 0.0
        %1309 = vmatpush1.msra.mxu0 0.0
        %1310 = vmatprep.subr.mxu0 0.0
        %1311 = vmatpush1.msra.mxu0 0.0
        %1312 = vmatprep.subr.mxu0 0.0
        %1313 = vmatpush1.msra.mxu0 0.0
        %1314 = vmatprep.subr.mxu0 0.0
        %1315 = vmatpush1.msra.mxu0 0.0
        %1316 = vmatprep.mubr.f32.mxu0 0.0
        %1317 = vmatmul.mubr.f32.gmra.mrb[0].mxu0 %v1250
        %v1318 = vpop.f32.mrb[0].mxu0
        %v1319 = vadd.f32 0.0, %v1318
        %v1320 = vpop.f32.mrb[0].mxu0
        %1321 = vdwg.mxu0
        %1323 = vset.pattern.permute.xlu0 0
        %1324 = vperm.xlu0 %1323, %v1247
        %v1325 = vpop.permute.xlu0 %1324
        %v1327 = vmul.f32 %v1325, %v1319
        %1329 = vset.pattern.permute.xlu0 0
        %1330 = vperm.xlu0 %1329, %v1248
        %v1331 = vpop.permute.xlu0 %1330
        %v1333 = vadd.f32 %v1327, %v1331
        %1334 = vst [vmem:[%s458] sm:$0xf] %v1333
        %s1335 = sand.u32 %s293, 1
        %s1336 = scalar_lea.sflag [#allocation3], %s1335
        %s1337 = sand.u32 %s293, 1
        %s1338 = smul.addr %s1337, 4
        %s1339 = scalar_lea.vmem [#allocation2], %s1338
        // Predicated region
        $region61: #{tpu_custom_call.1} parent=59 // pred_check
          %p1340 = pneg %p303
        $region62: #{tpu_custom_call.1} parent=59 // pred_check_branch
          %1342 = sbr.rel (%p1340) target = $region64
        $region63: #{tpu_custom_call.1} parent=59 // pred_region
          %s1344 = ssub.s32 64, 64
          %1345 = vsyncadd %s1336, %s1344
          %s1346 = sadd.s32 %s29, %s28
          %s1347 = smul.addr %s1346, 64
          %s1348 = scalar_lea.hbm %s10, %s1347
          %s1350 = sshll.u32 %s1339, 4
          %s1351 = int_to_ptr.vmem [resolvable:$true] %s1350
          %1353 = dma.vmem_to_hbm [thread:$0]  %s1351, 64, %s1348, %s1336
        $region64: #{tpu_custom_call.1} parent=59 // pred_fallthru
          _
      $region60: #{tpu_custom_call.1} parent=5 // pred_fallthru
        _
      %p1354 = scmp.le.s32.totalorder 2, %s19
      // Predicated region
      $region65: #{tpu_custom_call.1} parent=5 // pred_check
        %p1355 = pneg %p1354
      $region66: #{tpu_custom_call.1} parent=5 // pred_check_branch
        %1357 = sbr.rel (%p1355) target = $region68
      $region67: #{tpu_custom_call.1} parent=5 // pred_region
        %s1358 = ssub.s32 %s19, 2
        // Predicated region
        $region69: #{tpu_custom_call.1} parent=67 // pred_check
          %p1359 = pneg %p309
        $region70: #{tpu_custom_call.1} parent=67 // pred_check_branch
          %1361 = sbr.rel (%p1359) target = $region72
        $region71: #{tpu_custom_call.1} parent=67 // pred_region
          %s1362 = sand.u32 %s294, 1
          %s1363 = scalar_lea.sflag [#allocation3], %s1362
          %s1364 = sand.u32 %s294, 1
          %s1365 = smul.addr %s1364, 4
          %s1366 = scalar_lea.vmem [#allocation2], %s1365
          %1367 = dma.done %s1363, 64
        $region72: #{tpu_custom_call.1} parent=67 // pred_fallthru
          _
      $region68: #{tpu_custom_call.1} parent=5 // pred_fallthru
        _
    $region6: #{tpu_custom_call.1} parent=1 // loop_footer
      %s23 = sadd.s32 1, %s19
    $region7: #{tpu_custom_call.1} parent=1 // loop_footer_branch
      %18 = sbr.rel target = $region3
    $region8: #{tpu_custom_call.1} parent=1 // loop_exit
      _
    %1368 = vsyncpa [#allocation3], 1
    %s1369 = scalar_lea.sflag [#allocation3], 1
    %1370 = vsyncpa %s1369, 1

</llo_original>
